<compile_context>
chip_gen: v5e
topology: v5e:2x2
jax: 0.10.0
libtpu: 0.0.40
codegen_flags: <defaults>
</compile_context>

<pallas_src>
import functools

import jax
import jax.numpy as jnp
from jax.experimental import pallas as pl
from jax.experimental.pallas import tpu as pltpu


_LANE = 128
_VMEM_BUDGET = 12 * 1024 * 1024  # stay under v5e's 16 MiB default scoped VMEM


# ----------------------------- kernels ---------------------------------------
def _wp_attention_kernel(x_ref, w_ref, o_ref, *, filter_width, out_len):
    # x_ref: (TB, C, L_ext, Hp)  w_ref: (TB, L_ext, 1)  o_ref: (TB, C, out_len, Hp)
    x = x_ref[...].astype(jnp.float32)
    w = w_ref[...].astype(jnp.float32)[:, None, :, :]   # broadcast over C and lanes
    xw = x * w
    acc = xw[:, :, 0:out_len, :]
    for j in range(1, filter_width):                    # static unroll, W-1 VPU adds
        acc = acc + xw[:, :, j:j + out_len, :]
    o_ref[...] = acc.astype(o_ref.dtype)


def _wp_avgpool_kernel(x_ref, o_ref, *, filter_width, out_len):
    # x_ref: (TB, C, L_ext, Hp)  o_ref: (TB, C, out_len, Hp)
    x = x_ref[...].astype(jnp.float32)
    acc = x[:, :, 0:out_len, :]
    for j in range(1, filter_width):
        acc = acc + x[:, :, j:j + out_len, :]
    o_ref[...] = (acc * (1.0 / filter_width)).astype(o_ref.dtype)


# ----------------------------- helpers ----------------------------------------
def _pad_axis(a, axis, target):
    pad = target - a.shape[axis]
    if pad == 0:
        return a
    widths = [(0, 0)] * a.ndim
    widths[axis] = (0, pad)
    return jnp.pad(a, widths)


def _choose_batch_tile(B, C, L_ext, out_len, Hp, x_bytes, out_bytes, with_w):
    # Double-buffered per-batch-row footprint (input + output, + tiny weights).
    per_b = 2 * C * Hp * (L_ext * x_bytes + out_len * out_bytes)
    if with_w:
        per_b += 2 * L_ext * 4
    tb = max(1, _VMEM_BUDGET // per_b)
    tb = int(min(tb, 512, B))
    if B > 1:
        # Keep >= 2 grid steps so "parallel" can actually shard across 2 TCs (v7x).
        tb = min(tb, pl.cdiv(B, 2))
    return max(1, tb)


# ----------------------------- forward ----------------------------------------
def wp_layer_forward(x, attention_matrix, sentence_length, filter_width, attention):
    """x: (B, C, L_ext, H) with L_ext = sentence_length + filter_width - 1."""
    B, C, L_ext, H = x.shape
    W = filter_width
    if attention:
        out_len = sentence_length
        assert attention_matrix is not None, "attention=True requires attention_matrix"
        assert attention_matrix.shape == (B, L_ext), (
            f"attention_matrix must have shape (B, L_ext)=({B},{L_ext}); "
            f"got {attention_matrix.shape}")
    else:
        out_len = L_ext - W + 1
    assert L_ext >= W and out_len >= 1

    # Lane-dense layout: pad height to a multiple of 128 (unpadded afterwards).
    Hp = pl.cdiv(H, _LANE) * _LANE
    xp = _pad_axis(x, 3, Hp)

    out_dtype = x.dtype
    x_bytes = jnp.dtype(xp.dtype).itemsize
    out_bytes = jnp.dtype(out_dtype).itemsize

    TB = _choose_batch_tile(B, C, L_ext, out_len, Hp, x_bytes, out_bytes, attention)
    Bp = pl.cdiv(B, TB) * TB
    xp = _pad_axis(xp, 0, Bp)
    grid = (Bp // TB,)
    cparams = pltpu.CompilerParams(dimension_semantics=("parallel",))

    if attention:
        wp = _pad_axis(attention_matrix, 0, Bp)[:, :, None]          # (Bp, L_ext, 1)
        kernel = functools.partial(_wp_attention_kernel,
                                   filter_width=W, out_len=out_len)
        out = pl.pallas_call(
            kernel,
            out_shape=jax.ShapeDtypeStruct((Bp, C, out_len, Hp), out_dtype),
            grid=grid,
            in_specs=[
                pl.BlockSpec((TB, C, L_ext, Hp), lambda b: (b, 0, 0, 0)),
                pl.BlockSpec((TB, L_ext, 1), lambda b: (b, 0, 0)),
            ],
            out_specs=pl.BlockSpec((TB, C, out_len, Hp), lambda b: (b, 0, 0, 0)),
            compiler_params=cparams,
        )(xp, wp)
    else:
        kernel = functools.partial(_wp_avgpool_kernel,
                                   filter_width=W, out_len=out_len)
        out = pl.pallas_call(
            kernel,
            out_shape=jax.ShapeDtypeStruct((Bp, C, out_len, Hp), out_dtype),
            grid=grid,
            in_specs=[pl.BlockSpec((TB, C, L_ext, Hp), lambda b: (b, 0, 0, 0))],
            out_specs=pl.BlockSpec((TB, C, out_len, Hp), lambda b: (b, 0, 0, 0)),
            compiler_params=cparams,
        )(xp)

    return out[:B, :, :, :H]


class WpLayerPallas:
    """Column-wise (weighted) averaging over windows of `filter_width` rows."""

    def __init__(self, sentence_length, filter_width, attention):
        self.attention = attention
        self.sentence_length = sentence_length
        self.filter_width = filter_width

    def __call__(self, x, attention_matrix=None):
        return wp_layer_forward(x, attention_matrix, self.sentence_length,
                                self.filter_width, self.attention)


# ------------------- dependent helper (demo input generation) ------------------
# attention_matrix() from the source file: 1 / (1 + euclidean(x1_i, x2_j)).
# Only used to build a realistic attention input for the demo; it is not part of
# WpLayer.forward, so it stays in plain JAX.
def attention_matrix_jax(x1, x2, eps=1e-6):
    diff = x1 - jnp.transpose(x2, (0, 2, 1, 3))
    euclid = jnp.sqrt(jnp.sum(diff * diff, axis=3) + eps)
    return 1.0 / (euclid + 1.0)


# ------------------------------------ demo -------------------------------------
if __name__ == "__main__":
    B, C = 2, 1
    sentence_length, filter_width, height = 16, 3, 128
    L_ext = sentence_length + filter_width - 1                 # 18

    key = jax.random.PRNGKey(0)
    k1, k2, k3 = jax.random.split(key, 3)
    x = jax.random.normal(k1, (B, C, L_ext, height), jnp.float32)

    # ABCNN-style attention weights: attention matrix between two "conv outputs",
    # reduced over the other sentence's positions -> (B, L_ext).
    c1 = jax.random.normal(k2, (B, 1, L_ext, height), jnp.float32)
    c2 = jax.random.normal(k3, (B, 1, L_ext, height), jnp.float32)
    att = jnp.sum(attention_matrix_jax(c1, c2), axis=1)        # (B, L_ext)

    wp_att = WpLayerPallas(sentence_length, filter_width, attention=True)
    wp_avg = WpLayerPallas(sentence_length, filter_width, attention=False)

    out_att = wp_att(x, att)
    out_avg = wp_avg(x)
    jax.block_until_ready((out_att, out_avg))

    # ---- reference checks (plain JAX, mirrors the PyTorch forward exactly) ----
    def ref_att(xr, attr):
        a = attr[:, None, :, None]
        pools = [jnp.sum(xr[:, :, i:i + filter_width, :] * a[:, :, i:i + filter_width, :],
                         axis=2, keepdims=True)
                 for i in range(sentence_length)]
        return jnp.concatenate(pools, axis=2)

    def ref_avg(xr):
        pools = [jnp.mean(xr[:, :, i:i + filter_width, :], axis=2, keepdims=True)
                 for i in range(xr.shape[2] - filter_width + 1)]
        return jnp.concatenate(pools, axis=2)

    assert out_att.shape == (B, C, sentence_length, height)
    assert out_avg.shape == (B, C, sentence_length, height)
    assert bool(jnp.all(jnp.isfinite(out_att))) and bool(jnp.all(jnp.isfinite(out_avg)))
    assert bool(jnp.allclose(out_att, ref_att(x, att), atol=1e-4, rtol=1e-4))
    assert bool(jnp.allclose(out_avg, ref_avg(x), atol=1e-4, rtol=1e-4))

    # Secondary check: non-multiple-of-128 height exercises the lane-padding path.
    h2 = 96
    x2 = jax.random.normal(jax.random.PRNGKey(1), (B, C, L_ext, h2), jnp.float32)
    out_att2 = wp_att(x2, att)
    jax.block_until_ready(out_att2)
    assert out_att2.shape == (B, C, sentence_length, h2)
    assert bool(jnp.allclose(out_att2, ref_att(x2, att), atol=1e-4, rtol=1e-4))

    print("KERNEL_OK")
</pallas_src>

<mosaic_0001>
module attributes {stable_mosaic.version = 11 : i64} {
  func.func @_wp_attention_kernel(%arg0: i32, %arg1: memref<1x1x18x128xf32, #tpu.memory_space<vmem>>, %arg2: memref<1x18x1xf32, #tpu.memory_space<vmem>>, %arg3: memref<1x1x16x128xf32, #tpu.memory_space<vmem>>) attributes {dimension_semantics = [#tpu.dimension_semantics<parallel>], iteration_bounds = array<i64: 2>, scalar_prefetch = 0 : i64, scratch_operands = 0 : i64, tpu.core_type = #tpu.core_type<tc>, window_params = [{transform_indices = @transform_0, window_bounds = array<i64: 1, 1, 18, 128>}, {transform_indices = @transform_1, window_bounds = array<i64: 1, 18, 1>}, {transform_indices = @transform_2, window_bounds = array<i64: 1, 1, 16, 128>}]} {
    %c0 = arith.constant 0 : index
    %c0_0 = arith.constant 0 : index
    %c0_1 = arith.constant 0 : index
    %c0_2 = arith.constant 0 : index
    %0 = vector.load %arg1[%c0, %c0_0, %c0_1, %c0_2] : memref<1x1x18x128xf32, #tpu.memory_space<vmem>>, vector<1x1x18x128xf32>
    %c0_3 = arith.constant 0 : index
    %c0_4 = arith.constant 0 : index
    %c0_5 = arith.constant 0 : index
    %1 = vector.load %arg2[%c0_3, %c0_4, %c0_5] : memref<1x18x1xf32, #tpu.memory_space<vmem>>, vector<1x18x1xf32>
    %2 = vector.shape_cast %1 : vector<1x18x1xf32> to vector<1x1x18x1xf32>
    %3 = vector.broadcast %2 : vector<1x1x18x1xf32> to vector<1x1x18x128xf32>
    %4 = arith.mulf %0, %3 : vector<1x1x18x128xf32>
    %5 = vector.extract_strided_slice %4 {offsets = [0, 0, 0, 0], sizes = [1, 1, 16, 128], strides = [1, 1, 1, 1]} : vector<1x1x18x128xf32> to vector<1x1x16x128xf32>
    %6 = vector.extract_strided_slice %4 {offsets = [0, 0, 1, 0], sizes = [1, 1, 16, 128], strides = [1, 1, 1, 1]} : vector<1x1x18x128xf32> to vector<1x1x16x128xf32>
    %7 = arith.addf %5, %6 : vector<1x1x16x128xf32>
    %8 = vector.extract_strided_slice %4 {offsets = [0, 0, 2, 0], sizes = [1, 1, 16, 128], strides = [1, 1, 1, 1]} : vector<1x1x18x128xf32> to vector<1x1x16x128xf32>
    %9 = arith.addf %7, %8 : vector<1x1x16x128xf32>
    %c0_6 = arith.constant 0 : index
    %c0_7 = arith.constant 0 : index
    %c0_8 = arith.constant 0 : index
    %c0_9 = arith.constant 0 : index
    %10 = vector.load %arg3[%c0_6, %c0_7, %c0_8, %c0_9] : memref<1x1x16x128xf32, #tpu.memory_space<vmem>>, vector<1x1x16x128xf32>
    tpu.vector_store %arg3[%c0_6, %c0_7, %c0_8, %c0_9], %9 {strides = array<i32>} : memref<1x1x16x128xf32, #tpu.memory_space<vmem>>, vector<1x1x16x128xf32>,
    return
  }
  func.func @transform_0(%arg0: i32) -> (i32, i32, i32, i32) {
    %c0_i32 = arith.constant 0 : i32
    %c0_i32_0 = arith.constant 0 : i32
    %c0_i32_1 = arith.constant 0 : i32
    %c0_i32_2 = arith.constant 0 : i32
    return %arg0, %c0_i32, %c0_i32_0, %c0_i32_1 : i32, i32, i32, i32
  }
  func.func @transform_1(%arg0: i32) -> (i32, i32, i32) {
    %c0_i32 = arith.constant 0 : i32
    %c0_i32_0 = arith.constant 0 : i32
    %c0_i32_1 = arith.constant 0 : i32
    return %arg0, %c0_i32, %c0_i32_0 : i32, i32, i32
  }
  func.func @transform_2(%arg0: i32) -> (i32, i32, i32, i32) {
    %c0_i32 = arith.constant 0 : i32
    %c0_i32_0 = arith.constant 0 : i32
    %c0_i32_1 = arith.constant 0 : i32
    %c0_i32_2 = arith.constant 0 : i32
    return %arg0, %c0_i32, %c0_i32_0, %c0_i32_1 : i32, i32, i32, i32
  }
}

</mosaic_0001>

<llo_original>
// kernel: tpu_custom_call.1
$region0: #{tpu_custom_call.1}
  #allocation0 [shape = 'u32[]', space=smem, size = 0x4, offset = 0x4, fixed_abs, tag = 'smem constant byte address 0x4 - core index']
  #allocation1 [shape = 'u32[72,128]{1,0:T(1,128)}', space=vmem, size = 0x9000, scoped, tag = 'internal scratch']
  %s0 = inlined_call_operand.vmem [shape: f32[2,1,18,128], index: 0, kind: input, shape index: {}]
  %s1 = inlined_call_operand.vmem [shape: f32[2,18,1], index: 1, kind: input, shape index: {}]
  %s2 = inlined_call_operand.hbm [shape: f32[2,1,16,128], index: 2, kind: output, shape index: {}]
  %s3 = sld [smem:[#allocation0]]
  $region41: #{tpu_custom_call.1} parent=0
    _
  %s5 = ssub.s32 1, %s3
  %s6 = scalar_select 0, %s5, %s3
  $region1: #{tpu_custom_call.1} parent=0
    #allocation2 [shape = 'u8[16384]{0}', space=vmem, size = 0x4000, scoped, tag = 'output window, operand 0']
    #allocation3 [shape = 's32[2]{0}', space=sflag, size = 0x8, scoped, tag = 'scoped memory for tpu_custom_call.1']
    %7 = vsyncpa [#allocation3], 0
    %s8 = scalar_lea.sflag [#allocation3], 1
    %9 = vsyncpa %s8, 0
    loop: start=0, step=1, limit=4
    $region2: #{tpu_custom_call.1} parent=1 // loop_pre_header
      _
    $region3: #{tpu_custom_call.1} parent=1 // loop_header
      %s11 = sphi 0, %s15
      %p12 = scmp.ge.s32.totalorder %s11, 4
      %s21 = sphi 0, %s23
      %s24 = sphi 0, %s21
      %s25 = sphi 0, %s24
      %s41 = sphi 0, %s25
      %s47 = sphi 0, %s49
      %s50 = sphi 0, %s47
      %s51 = sphi 0, %s50
      %s67 = sphi 0, %s51
      %s73 = sphi 0, %s75
      %s76 = sphi 0, %s73
      %s77 = sphi 0, %s76
      %s93 = sphi 0, %s77
    $region4: #{tpu_custom_call.1} parent=1 // loop_header_branch
      %14 = sbr.rel (%p12) target = $region8
    $region5: #{tpu_custom_call.1} parent=1 // loop_body
      %s16 = ssub.s32 %s11, 1
      %s17 = ssub.s32 %s11, 2
      %s18 = sadd.s32 %s11, 1
      %s19 = ssub.s32 %s11, %s18
      %p20 = scmp.eq.s32.totalorder %s19, 0
      %s22 = sadd.s32 %s21, 1
      %s23 = scalar_select %p20, %s21, %s22
      %p26 = pneg %p20
      %p27 = scmp.eq.s32.totalorder %s11, 1
      %p28 = por %p26, %p27
      %p29 = scmp.ne.s32.totalorder %s21, %s24
      %p30 = scmp.eq.s32.totalorder %s11, 0
      %p31 = por %p29, %p30
      %p32 = scmp.ne.s32.totalorder %s21, %s24
      %p33 = scmp.eq.s32.totalorder %s16, 1
      %p34 = por %p32, %p33
      %p35 = scmp.ne.s32.totalorder %s24, %s25
      %p36 = scmp.eq.s32.totalorder %s16, 0
      %p37 = por %p35, %p36
      %p38 = scmp.ne.s32.totalorder %s24, %s25
      %p39 = scmp.eq.s32.totalorder %s17, 1
      %p40 = por %p38, %p39
      %p42 = scmp.ne.s32.totalorder %s25, %s41
      %p43 = scmp.eq.s32.totalorder %s17, 0
      %p44 = por %p42, %p43
      %s45 = ssub.s32 %s11, %s18
      %p46 = scmp.eq.s32.totalorder %s45, 0
      %s48 = sadd.s32 %s47, 1
      %s49 = scalar_select %p46, %s47, %s48
      %p52 = pneg %p46
      %p53 = scmp.eq.s32.totalorder %s11, 1
      %p54 = por %p52, %p53
      %p55 = scmp.ne.s32.totalorder %s47, %s50
      %p56 = scmp.eq.s32.totalorder %s11, 0
      %p57 = por %p55, %p56
      %p58 = scmp.ne.s32.totalorder %s47, %s50
      %p59 = scmp.eq.s32.totalorder %s16, 1
      %p60 = por %p58, %p59
      %p61 = scmp.ne.s32.totalorder %s50, %s51
      %p62 = scmp.eq.s32.totalorder %s16, 0
      %p63 = por %p61, %p62
      %p64 = scmp.ne.s32.totalorder %s50, %s51
      %p65 = scmp.eq.s32.totalorder %s17, 1
      %p66 = por %p64, %p65
      %p68 = scmp.ne.s32.totalorder %s51, %s67
      %p69 = scmp.eq.s32.totalorder %s17, 0
      %p70 = por %p68, %p69
      %s71 = ssub.s32 %s11, %s18
      %p72 = scmp.eq.s32.totalorder %s71, 0
      %s74 = sadd.s32 %s73, 1
      %s75 = scalar_select %p72, %s73, %s74
      %p78 = pneg %p72
      %p79 = scmp.eq.s32.totalorder %s11, 1
      %p80 = por %p78, %p79
      %p81 = scmp.ne.s32.totalorder %s73, %s76
      %p82 = scmp.eq.s32.totalorder %s11, 0
      %p83 = por %p81, %p82
      %p84 = scmp.ne.s32.totalorder %s73, %s76
      %p85 = scmp.eq.s32.totalorder %s16, 1
      %p86 = por %p84, %p85
      %p87 = scmp.ne.s32.totalorder %s76, %s77
      %p88 = scmp.eq.s32.totalorder %s16, 0
      %p89 = por %p87, %p88
      %p90 = scmp.ne.s32.totalorder %s76, %s77
      %p91 = scmp.eq.s32.totalorder %s17, 1
      %p92 = por %p90, %p91
      %p94 = scmp.ne.s32.totalorder %s77, %s93
      %p95 = scmp.eq.s32.totalorder %s17, 0
      %p96 = por %p94, %p95
      %p97 = scmp.le.s32.totalorder 1, %s11
      %p98 = scmp.lt.s32.totalorder %s11, 3
      %p99 = pnand %p97, %p98
      %p100 = pneg %p99
      // Predicated region
      $region9: #{tpu_custom_call.1} parent=5 // pred_check
        _
      $region10: #{tpu_custom_call.1} parent=5 // pred_check_branch
        %102 = sbr.rel (%p99) target = $region12
      $region11: #{tpu_custom_call.1} parent=5 // pred_region
        %s103 = ssub.s32 %s11, 1
      $region12: #{tpu_custom_call.1} parent=5 // pred_fallthru
        _
      %p104 = scmp.lt.s32.totalorder %s11, 2
      // Predicated region
      $region13: #{tpu_custom_call.1} parent=5 // pred_check
        %p105 = pneg %p104
      $region14: #{tpu_custom_call.1} parent=5 // pred_check_branch
        %107 = sbr.rel (%p105) target = $region16
      $region15: #{tpu_custom_call.1} parent=5 // pred_region
        // Predicated region
        $region17: #{tpu_custom_call.1} parent=15 // pred_check
          %p108 = pneg %p31
        $region18: #{tpu_custom_call.1} parent=15 // pred_check_branch
          %110 = sbr.rel (%p108) target = $region20
        $region19: #{tpu_custom_call.1} parent=15 // pred_region
          %p111 = scmp.lt.s32.totalorder %s11, 1
          %s112 = scalar_select %p111, %s11, 1
          %s113 = smul.addr %s112, 3
          %s114 = smul.addr %s113, 8
          %s115 = scalar_lea.vmem %s0, %s114
        $region20: #{tpu_custom_call.1} parent=15 // pred_fallthru
          _
        // Predicated region
        $region21: #{tpu_custom_call.1} parent=15 // pred_check
          %p116 = pneg %p57
        $region22: #{tpu_custom_call.1} parent=15 // pred_check_branch
          %118 = sbr.rel (%p116) target = $region24
        $region23: #{tpu_custom_call.1} parent=15 // pred_region
          %p119 = scmp.lt.s32.totalorder %s11, 1
          %s120 = scalar_select %p119, %s11, 1
          %s121 = smul.addr %s120, 3
          %s122 = smul.addr %s121, 8
          %s123 = scalar_lea.vmem %s1, %s122
        $region24: #{tpu_custom_call.1} parent=15 // pred_fallthru
          _
      $region16: #{tpu_custom_call.1} parent=5 // pred_fallthru
        _
      %p124 = scmp.le.s32.totalorder 1, %s11
      %p125 = scmp.lt.s32.totalorder %s11, 3
      %p126 = pnand %p124, %p125
      %p127 = pneg %p126
      // Predicated region
      $region25: #{tpu_custom_call.1} parent=5 // pred_check
        _
      $region26: #{tpu_custom_call.1} parent=5 // pred_check_branch
        %129 = sbr.rel (%p126) target = $region28
      $region27: #{tpu_custom_call.1} parent=5 // pred_region
        %s130 = ssub.s32 %s11, 1
        %p131 = scmp.lt.s32.totalorder %s16, 1
        %s132 = scalar_select %p131, %s16, 1
        %s133 = smul.addr %s132, 3
        %s134 = smul.addr %s133, 8
        %s135 = scalar_lea.vmem %s0, %s134
        %p136 = pneg %p37
        %p137 = pneg %p34
        %p138 = scmp.lt.s32.totalorder %s16, 1
        %s139 = scalar_select %p138, %s16, 1
        %s140 = smul.addr %s139, 3
        %s141 = smul.addr %s140, 8
        %s142 = scalar_lea.vmem %s1, %s141
        %p143 = pneg %p63
        %p144 = pneg %p60
        %p145 = pneg %p89
        %p146 = pneg %p86
        %s147 = sand.u32 %s76, 1
        %s148 = scalar_lea.sflag [#allocation3], %s147
        %s149 = sand.u32 %s76, 1
        %s150 = smul.addr %s149, 16
        %s151 = scalar_lea.vmem [#allocation2], %s150
        %p152 = scmp.lt.s32.totalorder %s16, 1
        %s153 = scalar_select %p152, %s16, 1
        %s154 = smul.addr %s153, 3
        %s155 = smul.addr %s154, 8
        %s156 = scalar_lea.vmem %s0, %s155
        %p157 = scmp.lt.s32.totalorder %s16, 1
        %s158 = scalar_select %p157, %s16, 1
        %s159 = smul.addr %s158, 3
        %s160 = smul.addr %s159, 8
        %s161 = scalar_lea.vmem %s1, %s160
        %v162 = vld [vmem:[%s156] sm:$0xff]
        %v163 = vld [vmem:[%s156 + $0x8] sm:$0xff]
        %v164 = vld [vmem:[%s156 + $0x10] sm:$0x3]
        %v165 = vld [vmem:[%s161] sm:$0xff]
        %v166 = vld [vmem:[%s161 + $0x8] sm:$0xff]
        %v167 = vld [vmem:[%s161 + $0x10] sm:$0x3]
        %169 = vset.pattern.permute.xlu0 0
        %170 = vperm.xlu0 %169, %v165
        %v171 = vpop.permute.xlu0 %170
        %174 = vset.pattern.permute.xlu0 0
        %175 = vperm.xlu0 %174, %v166
        %v176 = vpop.permute.xlu0 %175
        %179 = vset.pattern.permute.xlu0 0
        %180 = vperm.xlu0 %179, %v167
        %v181 = vpop.permute.xlu0 %180
        %v183 = vmul.f32 %v162, %v171
        %v184 = vmul.f32 %v163, %v176
        %v185 = vmul.f32 %v164, %v181
        %vm189 = vcmask 1046528
        %v190 = vrot.slane %v183, 1
        %v191 = vrot.slane %v184, 1
        %v192 = vsel %vm189, %v190, %v191
        %v193 = vrot.slane %v185, 1
        %v194 = vsel %vm189, %v191, %v193
        %v197 = vadd.f32 %v183, %v192
        %v198 = vadd.f32 %v184, %v194
        %vm199 = vcmask 1045504
        %v200 = vrot.slane %v183, 2
        %v201 = vrot.slane %v184, 2
        %v202 = vsel %vm199, %v200, %v201
        %v203 = vrot.slane %v185, 2
        %v204 = vsel %vm199, %v201, %v203
        %v207 = vadd.f32 %v197, %v202
        %v208 = vadd.f32 %v198, %v204
        %209 = vst [vmem:[%s151] sm:$0xff] %v207
        %210 = vst [vmem:[%s151 + $0x8] sm:$0xff] %v208
        %s211 = sand.u32 %s76, 1
        %s212 = scalar_lea.sflag [#allocation3], %s211
        %s213 = sand.u32 %s76, 1
        %s214 = smul.addr %s213, 16
        %s215 = scalar_lea.vmem [#allocation2], %s214
        // Predicated region
        $region29: #{tpu_custom_call.1} parent=27 // pred_check
          %p216 = pneg %p86
        $region30: #{tpu_custom_call.1} parent=27 // pred_check_branch
          %218 = sbr.rel (%p216) target = $region32
        $region31: #{tpu_custom_call.1} parent=27 // pred_region
          %220 = vsyncadd %s212, 0
          %s221 = smul.addr %s16, 2
          %s222 = smul.addr %s221, 8
          %s223 = scalar_lea.hbm %s2, %s222
          %s224 = sshll.u32 %s215, 4
          %s225 = int_to_ptr.vmem [resolvable:$true] %s224
          %s226 = sshll.u32 %s223, 4
          %s227 = int_to_ptr.hbm [resolvable:$true] %s226
          %232 = dma.vmem_to_hbm [thread:$0]  %s225, 256, %s227, %s212, 128, 128, 8
        $region32: #{tpu_custom_call.1} parent=27 // pred_fallthru
          _
      $region28: #{tpu_custom_call.1} parent=5 // pred_fallthru
        _
      %p233 = scmp.le.s32.totalorder 2, %s11
      // Predicated region
      $region33: #{tpu_custom_call.1} parent=5 // pred_check
        %p234 = pneg %p233
      $region34: #{tpu_custom_call.1} parent=5 // pred_check_branch
        %236 = sbr.rel (%p234) target = $region36
      $region35: #{tpu_custom_call.1} parent=5 // pred_region
        %s237 = ssub.s32 %s11, 2
        // Predicated region
        $region37: #{tpu_custom_call.1} parent=35 // pred_check
          %p238 = pneg %p92
        $region38: #{tpu_custom_call.1} parent=35 // pred_check_branch
          %240 = sbr.rel (%p238) target = $region40
        $region39: #{tpu_custom_call.1} parent=35 // pred_region
          %s241 = sand.u32 %s77, 1
          %s242 = scalar_lea.sflag [#allocation3], %s241
          %s243 = sand.u32 %s77, 1
          %s244 = smul.addr %s243, 16
          %s245 = scalar_lea.vmem [#allocation2], %s244
          %247 = dma.done %s242, 256
        $region40: #{tpu_custom_call.1} parent=35 // pred_fallthru
          _
      $region36: #{tpu_custom_call.1} parent=5 // pred_fallthru
        _
    $region6: #{tpu_custom_call.1} parent=1 // loop_footer
      %s15 = sadd.s32 1, %s11
    $region7: #{tpu_custom_call.1} parent=1 // loop_footer_branch
      %10 = sbr.rel target = $region3
    $region8: #{tpu_custom_call.1} parent=1 // loop_exit
      _
    %248 = vsyncpa [#allocation3], 1
    %s249 = scalar_lea.sflag [#allocation3], 1
    %250 = vsyncpa %s249, 1

</llo_original>
